<compile_context>
chip_gen: v7x
topology: tpu7x:2x2x1
jax: 0.10.0
libtpu: 0.0.40
codegen_flags: <defaults>
</compile_context>

<pallas_src>
import jax
import jax.numpy as jnp
from jax.experimental import pallas as pl
from jax.experimental.pallas import tpu as pltpu

PRELU_SLOPE = 0.05  # F.prelu(out, torch.tensor([0.05]))
LANE = 128          # TPU lane width: padded feature dims are multiples of this
SUBLANE = 8         # f32 sublane count: batch tiles are multiples of this


def _round_up(n, m):
    return ((n + m - 1) // m) * m


def _prelu(x):
    return jnp.where(x >= 0, x, PRELU_SLOPE * x)


def _mlp_kernel(x_ref, w1_ref, w2_ref, w3_ref, w4_ref,
                b1_ref, b2_ref, b3_ref, b4_ref,
                o1_ref, o2_ref, o3_ref, out_ref):
    """Fused 4-layer MLP + PReLU on one batch tile.

    x_ref:         (TB, d0)              zero-padded input tile (f32)
    wK_ref:        (d_{K-1}, d_K)        per-layer padded weights (bf16 or f32)
    bK_ref:        (1, d_K)              per-layer padded biases (f32)
    o1/o2/o3/out:  (TB, d1/d2/d3/d4)     lane-dense per-layer outputs (f32)

    Matmul operands run in the weights' dtype (bf16 on v6e/v7x for MXU
    throughput); accumulation, bias add and PReLU stay in f32.
    """
    cdt = w1_ref.dtype
    x = x_ref[...].astype(cdt)

    # layer1 + PReLU
    h1 = jnp.dot(x, w1_ref[...], preferred_element_type=jnp.float32) + b1_ref[...]
    a1 = _prelu(h1)
    o1_ref[...] = a1

    # layer2 + PReLU
    h2 = jnp.dot(a1.astype(cdt), w2_ref[...],
                 preferred_element_type=jnp.float32) + b2_ref[...]
    a2 = _prelu(h2)
    o2_ref[...] = a2

    # layer3 + PReLU
    h3 = jnp.dot(a2.astype(cdt), w3_ref[...],
                 preferred_element_type=jnp.float32) + b3_ref[...]
    a3 = _prelu(h3)
    o3_ref[...] = a3

    # layer4 (no activation)
    # NOTE: a further lever when compute-bound is splitting TB into 2 static
    # sub-chunks so layer-k matmul of chunk A overlaps the PReLU of chunk B.
    h4 = jnp.dot(a3.astype(cdt), w4_ref[...],
                 preferred_element_type=jnp.float32) + b4_ref[...]
    out_ref[...] = h4


def prepare_params(params, *, matmul_dtype=jnp.bfloat16):
    """One-time preparation (do NOT call per forward): zero-pad each layer to
    its own lane-aligned shape and cast weights to the matmul dtype."""
    ws = [params[f"w{i}"] for i in range(1, 5)]
    bs = [params[f"b{i}"] for i in range(1, 5)]
    dims = [ws[0].shape[0]] + [w.shape[1] for w in ws]        # [in, h, 2h, 4h, out]
    dpads = [_round_up(d, LANE) for d in dims]

    w_pad = tuple(
        jnp.pad(w, ((0, dpads[i] - w.shape[0]),
                    (0, dpads[i + 1] - w.shape[1]))).astype(matmul_dtype)
        for i, w in enumerate(ws))
    b_pad = tuple(
        jnp.pad(b.reshape(1, -1).astype(jnp.float32),
                ((0, 0), (0, dpads[i + 1] - b.shape[-1])))
        for i, b in enumerate(bs))
    return dict(w=w_pad, b=b_pad, dims=tuple(dims), dpads=tuple(dpads))


def net_forward(x, prepared, *, batch_tile=512):
    """x: [B, input_size] f32.  prepared: output of prepare_params.

    Returns (out, out1, out2, out3), matching Net.forward.
    """
    B, in_size = x.shape
    dims = prepared["dims"]
    dpads = prepared["dpads"]
    assert in_size == dims[0], (in_size, dims)
    d0, d1, d2, d3, d4 = dpads

    # Batch tile: multiple of 8 (f32 sublanes); split into >=2 tiles when the
    # batch is large enough so the "parallel" grid axis can actually shard
    # across both TensorCores on v7x.
    tb = min(batch_tile, max(SUBLANE, _round_up(pl.cdiv(B, 2), SUBLANE)))
    bpad = _round_up(max(B, tb), tb)
    x_pad = jnp.pad(x, ((0, bpad - B), (0, d0 - in_size)))
    grid = (bpad // tb,)

    w1, w2, w3, w4 = prepared["w"]
    b1, b2, b3, b4 = prepared["b"]

    # Cost / VMEM accounting based on the padded work the kernel really does.
    wbytes = sum(int(w.size) * w.dtype.itemsize for w in prepared["w"])
    bbytes = sum(int(b.size) * b.dtype.itemsize for b in prepared["b"])
    out_bytes = 4 * bpad * (d1 + d2 + d3 + d4)
    flops = 2 * bpad * (d0 * d1 + d1 * d2 + d2 * d3 + d3 * d4)
    bytes_accessed = int(x_pad.size) * 4 + wbytes + bbytes + out_bytes

    # Weights/biases are single-buffered (grid-invariant); input tile and the
    # four output tiles are double-buffered by the default pipeline.
    vmem_need = (wbytes + bbytes
                 + 2 * tb * d0 * 4
                 + 2 * tb * (d1 + d2 + d3 + d4) * 4)
    vmem_limit = min(64 << 20, max(32 << 20, int(1.5 * vmem_need) + (2 << 20)))

    def const_spec(shape):
        # Grid-invariant operand: constant index_map + single buffer.
        return pl.BlockSpec(shape, lambda i: (0, 0),
                            pipeline_mode=pl.Buffered(1))

    o1p, o2p, o3p, o4p = pl.pallas_call(
        _mlp_kernel,
        out_shape=(
            jax.ShapeDtypeStruct((bpad, d1), jnp.float32),
            jax.ShapeDtypeStruct((bpad, d2), jnp.float32),
            jax.ShapeDtypeStruct((bpad, d3), jnp.float32),
            jax.ShapeDtypeStruct((bpad, d4), jnp.float32),
        ),
        grid=grid,
        in_specs=[
            pl.BlockSpec((tb, d0), lambda i: (i, 0)),   # batch-tiled input
            const_spec((d0, d1)), const_spec((d1, d2)),
            const_spec((d2, d3)), const_spec((d3, d4)),
            const_spec((1, d1)), const_spec((1, d2)),
            const_spec((1, d3)), const_spec((1, d4)),
        ],
        out_specs=(
            pl.BlockSpec((tb, d1), lambda i: (i, 0)),
            pl.BlockSpec((tb, d2), lambda i: (i, 0)),
            pl.BlockSpec((tb, d3), lambda i: (i, 0)),
            pl.BlockSpec((tb, d4), lambda i: (i, 0)),
        ),
        compiler_params=pltpu.CompilerParams(
            dimension_semantics=("parallel",),   # shard batch across TCs (v7x)
            vmem_limit_bytes=vmem_limit),
        cost_estimate=pl.CostEstimate(
            flops=flops, transcendentals=0, bytes_accessed=bytes_accessed),
    )(x_pad, w1, w2, w3, w4, b1, b2, b3, b4)

    out1 = o1p[:B, :dims[1]]
    out2 = o2p[:B, :dims[2]]
    out3 = o3p[:B, :dims[3]]
    out = o4p[:B, :dims[4]]
    return out, out1, out2, out3


def init_params(key, input_size, hidden_size, output_size):
    """Deterministic synthetic init (uniform, roughly PyTorch Linear scale).
    Weights stored [in, out] (transposed vs. nn.Linear) so y = x @ W + b."""
    dims = [
        (input_size, hidden_size),
        (hidden_size, 2 * hidden_size),
        (2 * hidden_size, 4 * hidden_size),
        (4 * hidden_size, output_size),
    ]
    params = {}
    for i, (fan_in, fan_out) in enumerate(dims, start=1):
        key, kw, kb = jax.random.split(key, 3)
        bound = 1.0 / (fan_in ** 0.5)
        params[f"w{i}"] = jax.random.uniform(
            kw, (fan_in, fan_out), jnp.float32, -bound, bound)
        params[f"b{i}"] = jax.random.uniform(
            kb, (1, fan_out), jnp.float32, -bound, bound)
    return params


def reference_forward(x, params):
    """Pure-JAX f32 reference matching the PyTorch module."""
    o = x @ params["w1"] + params["b1"]
    o1 = _prelu(o)
    o = o1 @ params["w2"] + params["b2"]
    o2 = _prelu(o)
    o = o2 @ params["w3"] + params["b3"]
    o3 = _prelu(o)
    out = o3 @ params["w4"] + params["b4"]
    return out, o1, o2, o3


if __name__ == "__main__":
    key = jax.random.PRNGKey(0)
    batch, input_size, hidden_size, output_size = 8, 16, 32, 8

    kx, kp = jax.random.split(key)
    x = jax.random.normal(kx, (batch, input_size), jnp.float32)
    params = init_params(kp, input_size, hidden_size, output_size)
    refs = reference_forward(x, params)

    # 1) f32 matmul operands: tight check against the f32 reference.
    prep_f32 = prepare_params(params, matmul_dtype=jnp.float32)
    outs_f32 = jax.block_until_ready(net_forward(x, prep_f32))
    for got, want in zip(outs_f32, refs):
        assert got.shape == want.shape, (got.shape, want.shape)
        assert jnp.allclose(got, want, atol=1e-4, rtol=1e-4), (
            f"f32 mismatch: max abs err {jnp.max(jnp.abs(got - want))}")

    # 2) bf16 matmul operands (production default on v6e/v7x): f32 accumulate,
    #    looser tolerance appropriate for bf16 operand rounding.
    prep_bf16 = prepare_params(params, matmul_dtype=jnp.bfloat16)
    outs_bf16 = jax.block_until_ready(net_forward(x, prep_bf16))
    for got, want in zip(outs_bf16, refs):
        assert got.shape == want.shape, (got.shape, want.shape)
        assert jnp.allclose(got, want, atol=5e-2, rtol=5e-2), (
            f"bf16 mismatch: max abs err {jnp.max(jnp.abs(got - want))}")

    print("KERNEL_OK")
</pallas_src>

<mosaic_0001>
module attributes {stable_mosaic.version = 11 : i64} {
  func.func @_mlp_kernel(%arg0: i32, %arg1: memref<8x128xf32, #tpu.memory_space<vmem>>, %arg2: memref<128x128xf32, #tpu.memory_space<vmem>>, %arg3: memref<128x128xf32, #tpu.memory_space<vmem>>, %arg4: memref<128x128xf32, #tpu.memory_space<vmem>>, %arg5: memref<128x128xf32, #tpu.memory_space<vmem>>, %arg6: memref<1x128xf32, #tpu.memory_space<vmem>>, %arg7: memref<1x128xf32, #tpu.memory_space<vmem>>, %arg8: memref<1x128xf32, #tpu.memory_space<vmem>>, %arg9: memref<1x128xf32, #tpu.memory_space<vmem>>, %arg10: memref<8x128xf32, #tpu.memory_space<vmem>>, %arg11: memref<8x128xf32, #tpu.memory_space<vmem>>, %arg12: memref<8x128xf32, #tpu.memory_space<vmem>>, %arg13: memref<8x128xf32, #tpu.memory_space<vmem>>) attributes {dimension_semantics = [#tpu.dimension_semantics<parallel>], iteration_bounds = array<i64: 1>, scalar_prefetch = 0 : i64, scratch_operands = 0 : i64, tpu.core_type = #tpu.core_type<tc>, window_params = [{transform_indices = @transform_0, window_bounds = array<i64: 8, 128>}, {pipeline_mode = #tpu.pipeline_mode<synchronous>, transform_indices = @transform_1, window_bounds = array<i64: 128, 128>}, {pipeline_mode = #tpu.pipeline_mode<synchronous>, transform_indices = @transform_2, window_bounds = array<i64: 128, 128>}, {pipeline_mode = #tpu.pipeline_mode<synchronous>, transform_indices = @transform_3, window_bounds = array<i64: 128, 128>}, {pipeline_mode = #tpu.pipeline_mode<synchronous>, transform_indices = @transform_4, window_bounds = array<i64: 128, 128>}, {pipeline_mode = #tpu.pipeline_mode<synchronous>, transform_indices = @transform_5, window_bounds = array<i64: 1, 128>}, {pipeline_mode = #tpu.pipeline_mode<synchronous>, transform_indices = @transform_6, window_bounds = array<i64: 1, 128>}, {pipeline_mode = #tpu.pipeline_mode<synchronous>, transform_indices = @transform_7, window_bounds = array<i64: 1, 128>}, {pipeline_mode = #tpu.pipeline_mode<synchronous>, transform_indices = @transform_8, window_bounds = array<i64: 1, 128>}, {transform_indices = @transform_9, window_bounds = array<i64: 8, 128>}, {transform_indices = @transform_10, window_bounds = array<i64: 8, 128>}, {transform_indices = @transform_11, window_bounds = array<i64: 8, 128>}, {transform_indices = @transform_12, window_bounds = array<i64: 8, 128>}]} {
    %c0 = arith.constant 0 : index
    %c0_0 = arith.constant 0 : index
    %0 = vector.load %arg1[%c0, %c0_0] : memref<8x128xf32, #tpu.memory_space<vmem>>, vector<8x128xf32>
    %c0_1 = arith.constant 0 : index
    %c0_2 = arith.constant 0 : index
    %1 = vector.load %arg2[%c0_1, %c0_2] : memref<128x128xf32, #tpu.memory_space<vmem>>, vector<128x128xf32>
    %cst = arith.constant dense<0.000000e+00> : vector<8x128xf32>
    %2 = tpu.matmul %0, %1, %cst {dimension_numbers = #tpu.dot_dimension_numbers<[1], [0], [0], [1], [0, 0, 1, 1], [], []>} : vector<8x128xf32>, vector<128x128xf32>, vector<8x128xf32> -> vector<8x128xf32>
    %c0_3 = arith.constant 0 : index
    %c0_4 = arith.constant 0 : index
    %3 = vector.load %arg6[%c0_3, %c0_4] : memref<1x128xf32, #tpu.memory_space<vmem>>, vector<1x128xf32>
    %4 = vector.broadcast %3 : vector<1x128xf32> to vector<8x128xf32>
    %5 = arith.addf %2, %4 : vector<8x128xf32>
    %cst_5 = arith.constant 0.000000e+00 : f32
    %6 = vector.broadcast %cst_5 : f32 to vector<8x128xf32>
    %7 = arith.cmpf oge, %5, %6 : vector<8x128xf32>
    %cst_6 = arith.constant 5.000000e-02 : f32
    %8 = vector.broadcast %cst_6 : f32 to vector<8x128xf32>
    %9 = arith.mulf %8, %5 : vector<8x128xf32>
    %10 = arith.select %7, %5, %9 : vector<8x128xi1>, vector<8x128xf32>
    %c0_7 = arith.constant 0 : index
    %c0_8 = arith.constant 0 : index
    %11 = vector.load %arg10[%c0_7, %c0_8] : memref<8x128xf32, #tpu.memory_space<vmem>>, vector<8x128xf32>
    tpu.vector_store %arg10[%c0_7, %c0_8], %10 {strides = array<i32>} : memref<8x128xf32, #tpu.memory_space<vmem>>, vector<8x128xf32>,
    %c0_9 = arith.constant 0 : index
    %c0_10 = arith.constant 0 : index
    %12 = vector.load %arg3[%c0_9, %c0_10] : memref<128x128xf32, #tpu.memory_space<vmem>>, vector<128x128xf32>
    %cst_11 = arith.constant dense<0.000000e+00> : vector<8x128xf32>
    %13 = tpu.matmul %10, %12, %cst_11 {dimension_numbers = #tpu.dot_dimension_numbers<[1], [0], [0], [1], [0, 0, 1, 1], [], []>} : vector<8x128xf32>, vector<128x128xf32>, vector<8x128xf32> -> vector<8x128xf32>
    %c0_12 = arith.constant 0 : index
    %c0_13 = arith.constant 0 : index
    %14 = vector.load %arg7[%c0_12, %c0_13] : memref<1x128xf32, #tpu.memory_space<vmem>>, vector<1x128xf32>
    %15 = vector.broadcast %14 : vector<1x128xf32> to vector<8x128xf32>
    %16 = arith.addf %13, %15 : vector<8x128xf32>
    %cst_14 = arith.constant 0.000000e+00 : f32
    %17 = vector.broadcast %cst_14 : f32 to vector<8x128xf32>
    %18 = arith.cmpf oge, %16, %17 : vector<8x128xf32>
    %cst_15 = arith.constant 5.000000e-02 : f32
    %19 = vector.broadcast %cst_15 : f32 to vector<8x128xf32>
    %20 = arith.mulf %19, %16 : vector<8x128xf32>
    %21 = arith.select %18, %16, %20 : vector<8x128xi1>, vector<8x128xf32>
    %c0_16 = arith.constant 0 : index
    %c0_17 = arith.constant 0 : index
    %22 = vector.load %arg11[%c0_16, %c0_17] : memref<8x128xf32, #tpu.memory_space<vmem>>, vector<8x128xf32>
    tpu.vector_store %arg11[%c0_16, %c0_17], %21 {strides = array<i32>} : memref<8x128xf32, #tpu.memory_space<vmem>>, vector<8x128xf32>,
    %c0_18 = arith.constant 0 : index
    %c0_19 = arith.constant 0 : index
    %23 = vector.load %arg4[%c0_18, %c0_19] : memref<128x128xf32, #tpu.memory_space<vmem>>, vector<128x128xf32>
    %cst_20 = arith.constant dense<0.000000e+00> : vector<8x128xf32>
    %24 = tpu.matmul %21, %23, %cst_20 {dimension_numbers = #tpu.dot_dimension_numbers<[1], [0], [0], [1], [0, 0, 1, 1], [], []>} : vector<8x128xf32>, vector<128x128xf32>, vector<8x128xf32> -> vector<8x128xf32>
    %c0_21 = arith.constant 0 : index
    %c0_22 = arith.constant 0 : index
    %25 = vector.load %arg8[%c0_21, %c0_22] : memref<1x128xf32, #tpu.memory_space<vmem>>, vector<1x128xf32>
    %26 = vector.broadcast %25 : vector<1x128xf32> to vector<8x128xf32>
    %27 = arith.addf %24, %26 : vector<8x128xf32>
    %cst_23 = arith.constant 0.000000e+00 : f32
    %28 = vector.broadcast %cst_23 : f32 to vector<8x128xf32>
    %29 = arith.cmpf oge, %27, %28 : vector<8x128xf32>
    %cst_24 = arith.constant 5.000000e-02 : f32
    %30 = vector.broadcast %cst_24 : f32 to vector<8x128xf32>
    %31 = arith.mulf %30, %27 : vector<8x128xf32>
    %32 = arith.select %29, %27, %31 : vector<8x128xi1>, vector<8x128xf32>
    %c0_25 = arith.constant 0 : index
    %c0_26 = arith.constant 0 : index
    %33 = vector.load %arg12[%c0_25, %c0_26] : memref<8x128xf32, #tpu.memory_space<vmem>>, vector<8x128xf32>
    tpu.vector_store %arg12[%c0_25, %c0_26], %32 {strides = array<i32>} : memref<8x128xf32, #tpu.memory_space<vmem>>, vector<8x128xf32>,
    %c0_27 = arith.constant 0 : index
    %c0_28 = arith.constant 0 : index
    %34 = vector.load %arg5[%c0_27, %c0_28] : memref<128x128xf32, #tpu.memory_space<vmem>>, vector<128x128xf32>
    %cst_29 = arith.constant dense<0.000000e+00> : vector<8x128xf32>
    %35 = tpu.matmul %32, %34, %cst_29 {dimension_numbers = #tpu.dot_dimension_numbers<[1], [0], [0], [1], [0, 0, 1, 1], [], []>} : vector<8x128xf32>, vector<128x128xf32>, vector<8x128xf32> -> vector<8x128xf32>
    %c0_30 = arith.constant 0 : index
    %c0_31 = arith.constant 0 : index
    %36 = vector.load %arg9[%c0_30, %c0_31] : memref<1x128xf32, #tpu.memory_space<vmem>>, vector<1x128xf32>
    %37 = vector.broadcast %36 : vector<1x128xf32> to vector<8x128xf32>
    %38 = arith.addf %35, %37 : vector<8x128xf32>
    %c0_32 = arith.constant 0 : index
    %c0_33 = arith.constant 0 : index
    %39 = vector.load %arg13[%c0_32, %c0_33] : memref<8x128xf32, #tpu.memory_space<vmem>>, vector<8x128xf32>
    tpu.vector_store %arg13[%c0_32, %c0_33], %38 {strides = array<i32>} : memref<8x128xf32, #tpu.memory_space<vmem>>, vector<8x128xf32>,
    return
  }
  func.func @transform_0(%arg0: i32) -> (i32, i32) {
    %c0_i32 = arith.constant 0 : i32
    %c0_i32_0 = arith.constant 0 : i32
    return %arg0, %c0_i32 : i32, i32
  }
  func.func @transform_1(%arg0: i32) -> (i32, i32) {
    %c0_i32 = arith.constant 0 : i32
    %c0_i32_0 = arith.constant 0 : i32
    %c0_i32_1 = arith.constant 0 : i32
    return %c0_i32, %c0_i32_0 : i32, i32
  }
  func.func @transform_2(%arg0: i32) -> (i32, i32) {
    %c0_i32 = arith.constant 0 : i32
    %c0_i32_0 = arith.constant 0 : i32
    %c0_i32_1 = arith.constant 0 : i32
    return %c0_i32, %c0_i32_0 : i32, i32
  }
  func.func @transform_3(%arg0: i32) -> (i32, i32) {
    %c0_i32 = arith.constant 0 : i32
    %c0_i32_0 = arith.constant 0 : i32
    %c0_i32_1 = arith.constant 0 : i32
    return %c0_i32, %c0_i32_0 : i32, i32
  }
  func.func @transform_4(%arg0: i32) -> (i32, i32) {
    %c0_i32 = arith.constant 0 : i32
    %c0_i32_0 = arith.constant 0 : i32
    %c0_i32_1 = arith.constant 0 : i32
    return %c0_i32, %c0_i32_0 : i32, i32
  }
  func.func @transform_5(%arg0: i32) -> (i32, i32) {
    %c0_i32 = arith.constant 0 : i32
    %c0_i32_0 = arith.constant 0 : i32
    %c0_i32_1 = arith.constant 0 : i32
    return %c0_i32, %c0_i32_0 : i32, i32
  }
  func.func @transform_6(%arg0: i32) -> (i32, i32) {
    %c0_i32 = arith.constant 0 : i32
    %c0_i32_0 = arith.constant 0 : i32
    %c0_i32_1 = arith.constant 0 : i32
    return %c0_i32, %c0_i32_0 : i32, i32
  }
  func.func @transform_7(%arg0: i32) -> (i32, i32) {
    %c0_i32 = arith.constant 0 : i32
    %c0_i32_0 = arith.constant 0 : i32
    %c0_i32_1 = arith.constant 0 : i32
    return %c0_i32, %c0_i32_0 : i32, i32
  }
  func.func @transform_8(%arg0: i32) -> (i32, i32) {
    %c0_i32 = arith.constant 0 : i32
    %c0_i32_0 = arith.constant 0 : i32
    %c0_i32_1 = arith.constant 0 : i32
    return %c0_i32, %c0_i32_0 : i32, i32
  }
  func.func @transform_9(%arg0: i32) -> (i32, i32) {
    %c0_i32 = arith.constant 0 : i32
    %c0_i32_0 = arith.constant 0 : i32
    return %arg0, %c0_i32 : i32, i32
  }
  func.func @transform_10(%arg0: i32) -> (i32, i32) {
    %c0_i32 = arith.constant 0 : i32
    %c0_i32_0 = arith.constant 0 : i32
    return %arg0, %c0_i32 : i32, i32
  }
  func.func @transform_11(%arg0: i32) -> (i32, i32) {
    %c0_i32 = arith.constant 0 : i32
    %c0_i32_0 = arith.constant 0 : i32
    return %arg0, %c0_i32 : i32, i32
  }
  func.func @transform_12(%arg0: i32) -> (i32, i32) {
    %c0_i32 = arith.constant 0 : i32
    %c0_i32_0 = arith.constant 0 : i32
    return %arg0, %c0_i32 : i32, i32
  }
}

</mosaic_0001>

<llo_original>
// kernel: tpu_custom_call.1
$region0: #{tpu_custom_call.1}
  #allocation0 [shape = 'u32[]', space=smem, size = 0x4, offset = 0x4, fixed_abs, tag = 'smem constant byte address 0x4 - core index']
  #allocation1 [shape = 'u32[144,128]{1,0:T(1,128)}', space=vmem, size = 0x12000, scoped, tag = 'internal scratch']
  %s0 = inlined_call_operand.hbm [shape: f32[8,128], index: 0, kind: input, shape index: {}]
  %s1 = inlined_call_operand.hbm [shape: f32[128,128], index: 1, kind: input, shape index: {}]
  %s2 = inlined_call_operand.hbm [shape: f32[128,128], index: 2, kind: input, shape index: {}]
  %s3 = inlined_call_operand.hbm [shape: f32[128,128], index: 3, kind: input, shape index: {}]
  %s4 = inlined_call_operand.hbm [shape: f32[128,128], index: 4, kind: input, shape index: {}]
  %s5 = inlined_call_operand.vmem [shape: f32[1,128], index: 5, kind: input, shape index: {}]
  %s6 = inlined_call_operand.vmem [shape: f32[1,128], index: 6, kind: input, shape index: {}]
  %s7 = inlined_call_operand.vmem [shape: f32[1,128], index: 7, kind: input, shape index: {}]
  %s8 = inlined_call_operand.vmem [shape: f32[1,128], index: 8, kind: input, shape index: {}]
  %s9 = inlined_call_operand.hbm [shape: f32[8,128], index: 9, kind: output, shape index: {0}]
  %s10 = inlined_call_operand.hbm [shape: f32[8,128], index: 10, kind: output, shape index: {1}]
  %s11 = inlined_call_operand.hbm [shape: f32[8,128], index: 11, kind: output, shape index: {2}]
  %s12 = inlined_call_operand.hbm [shape: f32[8,128], index: 12, kind: output, shape index: {3}]
  %13 = xla_tuple %s9, %s10, %s11, %s12
  %s14 = sld [smem:[#allocation0]]
  $region90: #{tpu_custom_call.1} parent=0
    _
  %s16 = ssub.s32 1, %s14
  %s17 = scalar_select 0, %s16, %s14
  $region1: #{tpu_custom_call.1} parent=0
    #allocation2 [shape = 'u8[4096]{0}', space=vmem, size = 0x1000, scoped, tag = 'input window, operand 0, single buffered']
    #allocation3 [shape = 's32[1]{0}', space=sflag, size = 0x4, scoped, tag = 'scoped memory for tpu_custom_call.1']
    #allocation4 [shape = 's32[1]{0}', space=sflag, size = 0x4, scoped, tag = 'scoped memory for tpu_custom_call.1']
    #allocation5 [shape = 'u8[65536]{0}', space=vmem, size = 0x10000, scoped, tag = 'input window, operand 1, single buffered']
    #allocation6 [shape = 's32[1]{0}', space=sflag, size = 0x4, scoped, tag = 'scoped memory for tpu_custom_call.1']
    #allocation7 [shape = 'u8[65536]{0}', space=vmem, size = 0x10000, scoped, tag = 'input window, operand 2, single buffered']
    #allocation8 [shape = 'u8[65536]{0}', space=vmem, size = 0x10000, scoped, tag = 'input window, operand 3, single buffered']
    #allocation9 [shape = 's32[1]{0}', space=sflag, size = 0x4, scoped, tag = 'scoped memory for tpu_custom_call.1']
    #allocation10 [shape = 'u8[65536]{0}', space=vmem, size = 0x10000, scoped, tag = 'input window, operand 4, single buffered']
    #allocation11 [shape = 'u8[4096]{0}', space=vmem, size = 0x1000, scoped, tag = 'output window, operand 0, single buffered']
    #allocation12 [shape = 'u8[4096]{0}', space=vmem, size = 0x1000, scoped, tag = 'output window, operand 1, single buffered']
    #allocation13 [shape = 's32[1]{0}', space=sflag, size = 0x4, scoped, tag = 'scoped memory for tpu_custom_call.1']
    #allocation14 [shape = 'u8[4096]{0}', space=vmem, size = 0x1000, scoped, tag = 'output window, operand 2, single buffered']
    #allocation15 [shape = 'u8[4096]{0}', space=vmem, size = 0x1000, scoped, tag = 'output window, operand 3, single buffered']
    #allocation16 [shape = 's32[1]{0}', space=sflag, size = 0x4, scoped, tag = 'scoped memory for tpu_custom_call.1']
    %18 = vsyncpa [#allocation3], 0
    %19 = vsyncpa [#allocation6], 0
    %20 = vsyncpa [#allocation9], 0
    %21 = vsyncpa [#allocation4], 0
    %22 = vsyncpa [#allocation13], 0
    %23 = vsyncpa [#allocation16], 0
    // Predicated region
    $region2: #{tpu_custom_call.1} parent=1 // pred_check
      _
    $region3: #{tpu_custom_call.1} parent=1 // pred_check_branch
      %25 = sbr.rel (0) target = $region5
    $region4: #{tpu_custom_call.1} parent=1 // pred_region
      %s27 = ssub.s32 128, 128
      %28 = vsyncadd [#allocation3], %s27
      %s30 = sshll.u32 [#allocation2], 4
      %s31 = int_to_ptr.vmem [resolvable:$true] %s30
      %33 = dma.hbm_to_vmem [thread:$0]  %s0, 128, %s31, [#allocation3]
    $region5: #{tpu_custom_call.1} parent=1 // pred_fallthru
      _
    // Predicated region
    $region6: #{tpu_custom_call.1} parent=1 // pred_check
      _
    $region7: #{tpu_custom_call.1} parent=1 // pred_check_branch
      %35 = sbr.rel (0) target = $region9
    $region8: #{tpu_custom_call.1} parent=1 // pred_region
      %s37 = ssub.s32 2048, 2048
      %38 = vsyncadd [#allocation6], %s37
      %s39 = sshll.u32 [#allocation5], 4
      %s40 = int_to_ptr.vmem [resolvable:$true] %s39
      %45 = dma.hbm_to_vmem [thread:$0]  %s1, 2048, %s40, [#allocation6], 128, 128, 8
    $region9: #{tpu_custom_call.1} parent=1 // pred_fallthru
      _
    // Predicated region
    $region10: #{tpu_custom_call.1} parent=1 // pred_check
      _
    $region11: #{tpu_custom_call.1} parent=1 // pred_check_branch
      %47 = sbr.rel (0) target = $region13
    $region12: #{tpu_custom_call.1} parent=1 // pred_region
      %s49 = ssub.s32 2048, 2048
      %50 = vsyncadd [#allocation6], %s49
      %s51 = sshll.u32 [#allocation7], 4
      %s52 = int_to_ptr.vmem [resolvable:$true] %s51
      %57 = dma.hbm_to_vmem [thread:$0]  %s2, 2048, %s52, [#allocation6], 128, 128, 8
    $region13: #{tpu_custom_call.1} parent=1 // pred_fallthru
      _
    // Predicated region
    $region14: #{tpu_custom_call.1} parent=1 // pred_check
      _
    $region15: #{tpu_custom_call.1} parent=1 // pred_check_branch
      %59 = sbr.rel (0) target = $region17
    $region16: #{tpu_custom_call.1} parent=1 // pred_region
      %s61 = ssub.s32 2048, 2048
      %62 = vsyncadd [#allocation9], %s61
      %s63 = sshll.u32 [#allocation8], 4
      %s64 = int_to_ptr.vmem [resolvable:$true] %s63
      %69 = dma.hbm_to_vmem [thread:$0]  %s3, 2048, %s64, [#allocation9], 128, 128, 8
    $region17: #{tpu_custom_call.1} parent=1 // pred_fallthru
      _
    // Predicated region
    $region18: #{tpu_custom_call.1} parent=1 // pred_check
      _
    $region19: #{tpu_custom_call.1} parent=1 // pred_check_branch
      %71 = sbr.rel (0) target = $region21
    $region20: #{tpu_custom_call.1} parent=1 // pred_region
      %s73 = ssub.s32 2048, 2048
      %74 = vsyncadd [#allocation9], %s73
      %s75 = sshll.u32 [#allocation10], 4
      %s76 = int_to_ptr.vmem [resolvable:$true] %s75
      %81 = dma.hbm_to_vmem [thread:$0]  %s4, 2048, %s76, [#allocation9], 128, 128, 8
    $region21: #{tpu_custom_call.1} parent=1 // pred_fallthru
      _
    // Predicated region
    $region22: #{tpu_custom_call.1} parent=1 // pred_check
      _
    $region23: #{tpu_custom_call.1} parent=1 // pred_check_branch
      %83 = sbr.rel (0) target = $region25
    $region24: #{tpu_custom_call.1} parent=1 // pred_region
      _
    $region25: #{tpu_custom_call.1} parent=1 // pred_fallthru
      _
    // Predicated region
    $region26: #{tpu_custom_call.1} parent=1 // pred_check
      _
    $region27: #{tpu_custom_call.1} parent=1 // pred_check_branch
      %85 = sbr.rel (0) target = $region29
    $region28: #{tpu_custom_call.1} parent=1 // pred_region
      _
    $region29: #{tpu_custom_call.1} parent=1 // pred_fallthru
      _
    // Predicated region
    $region30: #{tpu_custom_call.1} parent=1 // pred_check
      _
    $region31: #{tpu_custom_call.1} parent=1 // pred_check_branch
      %87 = sbr.rel (0) target = $region33
    $region32: #{tpu_custom_call.1} parent=1 // pred_region
      _
    $region33: #{tpu_custom_call.1} parent=1 // pred_fallthru
      _
    // Predicated region
    $region34: #{tpu_custom_call.1} parent=1 // pred_check
      _
    $region35: #{tpu_custom_call.1} parent=1 // pred_check_branch
      %89 = sbr.rel (0) target = $region37
    $region36: #{tpu_custom_call.1} parent=1 // pred_region
      _
    $region37: #{tpu_custom_call.1} parent=1 // pred_fallthru
      _
    // Predicated region
    $region38: #{tpu_custom_call.1} parent=1 // pred_check
      _
    $region39: #{tpu_custom_call.1} parent=1 // pred_check_branch
      %91 = sbr.rel (0) target = $region41
    $region40: #{tpu_custom_call.1} parent=1 // pred_region
      %92 = dma.done [#allocation3], 128
    $region41: #{tpu_custom_call.1} parent=1 // pred_fallthru
      _
    // Predicated region
    $region42: #{tpu_custom_call.1} parent=1 // pred_check
      _
    $region43: #{tpu_custom_call.1} parent=1 // pred_check_branch
      %94 = sbr.rel (0) target = $region45
    $region44: #{tpu_custom_call.1} parent=1 // pred_region
      %95 = dma.done [#allocation6], 2048
    $region45: #{tpu_custom_call.1} parent=1 // pred_fallthru
      _
    // Predicated region
    $region46: #{tpu_custom_call.1} parent=1 // pred_check
      _
    $region47: #{tpu_custom_call.1} parent=1 // pred_check_branch
      %97 = sbr.rel (0) target = $region49
    $region48: #{tpu_custom_call.1} parent=1 // pred_region
      %98 = dma.done [#allocation6], 2048
    $region49: #{tpu_custom_call.1} parent=1 // pred_fallthru
      _
    // Predicated region
    $region50: #{tpu_custom_call.1} parent=1 // pred_check
      _
    $region51: #{tpu_custom_call.1} parent=1 // pred_check_branch
      %100 = sbr.rel (0) target = $region53
    $region52: #{tpu_custom_call.1} parent=1 // pred_region
      %101 = dma.done [#allocation9], 2048
    $region53: #{tpu_custom_call.1} parent=1 // pred_fallthru
      _
    // Predicated region
    $region54: #{tpu_custom_call.1} parent=1 // pred_check
      _
    $region55: #{tpu_custom_call.1} parent=1 // pred_check_branch
      %103 = sbr.rel (0) target = $region57
    $region56: #{tpu_custom_call.1} parent=1 // pred_region
      %104 = dma.done [#allocation9], 2048
    $region57: #{tpu_custom_call.1} parent=1 // pred_fallthru
      _
    %v105 = vld [vmem:[#allocation2] sm:$0xff]
    %v106 = vld [vmem:[#allocation5] sm:$0xff]
    %v107 = vld [vmem:[#allocation5 + $0x8] sm:$0xff]
    %v108 = vld [vmem:[#allocation5 + $0x10] sm:$0xff]
    %v109 = vld [vmem:[#allocation5 + $0x18] sm:$0xff]
    %v110 = vld [vmem:[#allocation5 + $0x20] sm:$0xff]
    %v111 = vld [vmem:[#allocation5 + $0x28] sm:$0xff]
    %v112 = vld [vmem:[#allocation5 + $0x30] sm:$0xff]
    %v113 = vld [vmem:[#allocation5 + $0x38] sm:$0xff]
    %v114 = vld [vmem:[#allocation5 + $0x40] sm:$0xff]
    %v115 = vld [vmem:[#allocation5 + $0x48] sm:$0xff]
    %v116 = vld [vmem:[#allocation5 + $0x50] sm:$0xff]
    %v117 = vld [vmem:[#allocation5 + $0x58] sm:$0xff]
    %v118 = vld [vmem:[#allocation5 + $0x60] sm:$0xff]
    %v119 = vld [vmem:[#allocation5 + $0x68] sm:$0xff]
    %v120 = vld [vmem:[#allocation5 + $0x70] sm:$0xff]
    %v121 = vld [vmem:[#allocation5 + $0x78] sm:$0xff]
    %v122 = vld [vmem:[%s5] sm:$0x1]
    %v124 = vlaneseq
    %v125 = vshrl.u32 %v124, 7
    %v126 = vsub.s32 0, %v125
    %v127 = vrot.slane %v122, %v126
    %129 = vmatprep.subr.mxu0 0.0
    %130 = vmatpush1.msra.mxu0 %v106
    %131 = vmatprep.subr.mxu0 0.0
    %132 = vmatpush1.msra.mxu0 %v107
    %133 = vmatprep.subr.mxu0 0.0
    %134 = vmatpush1.msra.mxu0 %v108
    %135 = vmatprep.subr.mxu0 0.0
    %136 = vmatpush1.msra.mxu0 %v109
    %137 = vmatprep.subr.mxu0 0.0
    %138 = vmatpush1.msra.mxu0 %v110
    %139 = vmatprep.subr.mxu0 0.0
    %140 = vmatpush1.msra.mxu0 %v111
    %141 = vmatprep.subr.mxu0 0.0
    %142 = vmatpush1.msra.mxu0 %v112
    %143 = vmatprep.subr.mxu0 0.0
    %144 = vmatpush1.msra.mxu0 %v113
    %145 = vmatprep.subr.mxu0 0.0
    %146 = vmatpush1.msra.mxu0 %v114
    %147 = vmatprep.subr.mxu0 0.0
    %148 = vmatpush1.msra.mxu0 %v115
    %149 = vmatprep.subr.mxu0 0.0
    %150 = vmatpush1.msra.mxu0 %v116
    %151 = vmatprep.subr.mxu0 0.0
    %152 = vmatpush1.msra.mxu0 %v117
    %153 = vmatprep.subr.mxu0 0.0
    %154 = vmatpush1.msra.mxu0 %v118
    %155 = vmatprep.subr.mxu0 0.0
    %156 = vmatpush1.msra.mxu0 %v119
    %157 = vmatprep.subr.mxu0 0.0
    %158 = vmatpush1.msra.mxu0 %v120
    %159 = vmatprep.subr.mxu0 0.0
    %160 = vmatpush1.msra.mxu0 %v121
    %161 = vmatprep.subr.mxu0 0.0
    %162 = vmatpush1.msra.mxu0 0.0
    %163 = vmatprep.subr.mxu0 0.0
    %164 = vmatpush1.msra.mxu0 0.0
    %165 = vmatprep.subr.mxu0 0.0
    %166 = vmatpush1.msra.mxu0 0.0
    %167 = vmatprep.subr.mxu0 0.0
    %168 = vmatpush1.msra.mxu0 0.0
    %169 = vmatprep.subr.mxu0 0.0
    %170 = vmatpush1.msra.mxu0 0.0
    %171 = vmatprep.subr.mxu0 0.0
    %172 = vmatpush1.msra.mxu0 0.0
    %173 = vmatprep.subr.mxu0 0.0
    %174 = vmatpush1.msra.mxu0 0.0
    %175 = vmatprep.subr.mxu0 0.0
    %176 = vmatpush1.msra.mxu0 0.0
    %177 = vmatprep.subr.mxu0 0.0
    %178 = vmatpush1.msra.mxu0 0.0
    %179 = vmatprep.subr.mxu0 0.0
    %180 = vmatpush1.msra.mxu0 0.0
    %181 = vmatprep.subr.mxu0 0.0
    %182 = vmatpush1.msra.mxu0 0.0
    %183 = vmatprep.subr.mxu0 0.0
    %184 = vmatpush1.msra.mxu0 0.0
    %185 = vmatprep.subr.mxu0 0.0
    %186 = vmatpush1.msra.mxu0 0.0
    %187 = vmatprep.subr.mxu0 0.0
    %188 = vmatpush1.msra.mxu0 0.0
    %189 = vmatprep.subr.mxu0 0.0
    %190 = vmatpush1.msra.mxu0 0.0
    %191 = vmatprep.subr.mxu0 0.0
    %192 = vmatpush1.msra.mxu0 0.0
    %193 = vmatprep.mubr.f32.mxu0 0.0
    %194 = vmatmul.mubr.f32.gmra.mrb[0].mxu0 %v105
    %v195 = vpop.f32.mrb[0].mxu0
    %v196 = vadd.f32 %v127, %v195
    %v197 = vpop.f32.mrb[0].mxu0
    %198 = vdwg.mxu0
    %vm199 = vcmp.ge.f32.partialorder %v196, 0.0
    %v200 = vmul.f32 %v196, 0.05
    %v201 = vsel %vm199, %v196, %v200
    %202 = vst [vmem:[#allocation11] sm:$0xff] %v201
    %v203 = vld [vmem:[#allocation7] sm:$0xff]
    %v204 = vld [vmem:[#allocation7 + $0x8] sm:$0xff]
    %v205 = vld [vmem:[#allocation7 + $0x10] sm:$0xff]
    %v206 = vld [vmem:[#allocation7 + $0x18] sm:$0xff]
    %v207 = vld [vmem:[#allocation7 + $0x20] sm:$0xff]
    %v208 = vld [vmem:[#allocation7 + $0x28] sm:$0xff]
    %v209 = vld [vmem:[#allocation7 + $0x30] sm:$0xff]
    %v210 = vld [vmem:[#allocation7 + $0x38] sm:$0xff]
    %v211 = vld [vmem:[#allocation7 + $0x40] sm:$0xff]
    %v212 = vld [vmem:[#allocation7 + $0x48] sm:$0xff]
    %v213 = vld [vmem:[#allocation7 + $0x50] sm:$0xff]
    %v214 = vld [vmem:[#allocation7 + $0x58] sm:$0xff]
    %v215 = vld [vmem:[#allocation7 + $0x60] sm:$0xff]
    %v216 = vld [vmem:[#allocation7 + $0x68] sm:$0xff]
    %v217 = vld [vmem:[#allocation7 + $0x70] sm:$0xff]
    %v218 = vld [vmem:[#allocation7 + $0x78] sm:$0xff]
    %v219 = vld [vmem:[%s6] sm:$0x1]
    %v221 = vlaneseq
    %v222 = vshrl.u32 %v221, 7
    %v223 = vsub.s32 0, %v222
    %v224 = vrot.slane %v219, %v223
    %226 = vmatprep.subr.mxu0 0.0
    %227 = vmatpush1.msra.mxu0 %v203
    %228 = vmatprep.subr.mxu0 0.0
    %229 = vmatpush1.msra.mxu0 %v204
    %230 = vmatprep.subr.mxu0 0.0
    %231 = vmatpush1.msra.mxu0 %v205
    %232 = vmatprep.subr.mxu0 0.0
    %233 = vmatpush1.msra.mxu0 %v206
    %234 = vmatprep.subr.mxu0 0.0
    %235 = vmatpush1.msra.mxu0 %v207
    %236 = vmatprep.subr.mxu0 0.0
    %237 = vmatpush1.msra.mxu0 %v208
    %238 = vmatprep.subr.mxu0 0.0
    %239 = vmatpush1.msra.mxu0 %v209
    %240 = vmatprep.subr.mxu0 0.0
    %241 = vmatpush1.msra.mxu0 %v210
    %242 = vmatprep.subr.mxu0 0.0
    %243 = vmatpush1.msra.mxu0 %v211
    %244 = vmatprep.subr.mxu0 0.0
    %245 = vmatpush1.msra.mxu0 %v212
    %246 = vmatprep.subr.mxu0 0.0
    %247 = vmatpush1.msra.mxu0 %v213
    %248 = vmatprep.subr.mxu0 0.0
    %249 = vmatpush1.msra.mxu0 %v214
    %250 = vmatprep.subr.mxu0 0.0
    %251 = vmatpush1.msra.mxu0 %v215
    %252 = vmatprep.subr.mxu0 0.0
    %253 = vmatpush1.msra.mxu0 %v216
    %254 = vmatprep.subr.mxu0 0.0
    %255 = vmatpush1.msra.mxu0 %v217
    %256 = vmatprep.subr.mxu0 0.0
    %257 = vmatpush1.msra.mxu0 %v218
    %258 = vmatprep.subr.mxu0 0.0
    %259 = vmatpush1.msra.mxu0 0.0
    %260 = vmatprep.subr.mxu0 0.0
    %261 = vmatpush1.msra.mxu0 0.0
    %262 = vmatprep.subr.mxu0 0.0
    %263 = vmatpush1.msra.mxu0 0.0
    %264 = vmatprep.subr.mxu0 0.0
    %265 = vmatpush1.msra.mxu0 0.0
    %266 = vmatprep.subr.mxu0 0.0
    %267 = vmatpush1.msra.mxu0 0.0
    %268 = vmatprep.subr.mxu0 0.0
    %269 = vmatpush1.msra.mxu0 0.0
    %270 = vmatprep.subr.mxu0 0.0
    %271 = vmatpush1.msra.mxu0 0.0
    %272 = vmatprep.subr.mxu0 0.0
    %273 = vmatpush1.msra.mxu0 0.0
    %274 = vmatprep.subr.mxu0 0.0
    %275 = vmatpush1.msra.mxu0 0.0
    %276 = vmatprep.subr.mxu0 0.0
    %277 = vmatpush1.msra.mxu0 0.0
    %278 = vmatprep.subr.mxu0 0.0
    %279 = vmatpush1.msra.mxu0 0.0
    %280 = vmatprep.subr.mxu0 0.0
    %281 = vmatpush1.msra.mxu0 0.0
    %282 = vmatprep.subr.mxu0 0.0
    %283 = vmatpush1.msra.mxu0 0.0
    %284 = vmatprep.subr.mxu0 0.0
    %285 = vmatpush1.msra.mxu0 0.0
    %286 = vmatprep.subr.mxu0 0.0
    %287 = vmatpush1.msra.mxu0 0.0
    %288 = vmatprep.subr.mxu0 0.0
    %289 = vmatpush1.msra.mxu0 0.0
    %290 = vmatprep.mubr.f32.mxu0 0.0
    %291 = vmatmul.mubr.f32.gmra.mrb[0].mxu0 %v201
    %v292 = vpop.f32.mrb[0].mxu0
    %v293 = vadd.f32 %v224, %v292
    %v294 = vpop.f32.mrb[0].mxu0
    %295 = vdwg.mxu0
    %vm296 = vcmp.ge.f32.partialorder %v293, 0.0
    %v297 = vmul.f32 %v293, 0.05
    %v298 = vsel %vm296, %v293, %v297
    %299 = vst [vmem:[#allocation12] sm:$0xff] %v298
    %v300 = vld [vmem:[#allocation8] sm:$0xff]
    %v301 = vld [vmem:[#allocation8 + $0x8] sm:$0xff]
    %v302 = vld [vmem:[#allocation8 + $0x10] sm:$0xff]
    %v303 = vld [vmem:[#allocation8 + $0x18] sm:$0xff]
    %v304 = vld [vmem:[#allocation8 + $0x20] sm:$0xff]
    %v305 = vld [vmem:[#allocation8 + $0x28] sm:$0xff]
    %v306 = vld [vmem:[#allocation8 + $0x30] sm:$0xff]
    %v307 = vld [vmem:[#allocation8 + $0x38] sm:$0xff]
    %v308 = vld [vmem:[#allocation8 + $0x40] sm:$0xff]
    %v309 = vld [vmem:[#allocation8 + $0x48] sm:$0xff]
    %v310 = vld [vmem:[#allocation8 + $0x50] sm:$0xff]
    %v311 = vld [vmem:[#allocation8 + $0x58] sm:$0xff]
    %v312 = vld [vmem:[#allocation8 + $0x60] sm:$0xff]
    %v313 = vld [vmem:[#allocation8 + $0x68] sm:$0xff]
    %v314 = vld [vmem:[#allocation8 + $0x70] sm:$0xff]
    %v315 = vld [vmem:[#allocation8 + $0x78] sm:$0xff]
    %v316 = vld [vmem:[%s7] sm:$0x1]
    %v318 = vlaneseq
    %v319 = vshrl.u32 %v318, 7
    %v320 = vsub.s32 0, %v319
    %v321 = vrot.slane %v316, %v320
    %323 = vmatprep.subr.mxu0 0.0
    %324 = vmatpush1.msra.mxu0 %v300
    %325 = vmatprep.subr.mxu0 0.0
    %326 = vmatpush1.msra.mxu0 %v301
    %327 = vmatprep.subr.mxu0 0.0
    %328 = vmatpush1.msra.mxu0 %v302
    %329 = vmatprep.subr.mxu0 0.0
    %330 = vmatpush1.msra.mxu0 %v303
    %331 = vmatprep.subr.mxu0 0.0
    %332 = vmatpush1.msra.mxu0 %v304
    %333 = vmatprep.subr.mxu0 0.0
    %334 = vmatpush1.msra.mxu0 %v305
    %335 = vmatprep.subr.mxu0 0.0
    %336 = vmatpush1.msra.mxu0 %v306
    %337 = vmatprep.subr.mxu0 0.0
    %338 = vmatpush1.msra.mxu0 %v307
    %339 = vmatprep.subr.mxu0 0.0
    %340 = vmatpush1.msra.mxu0 %v308
    %341 = vmatprep.subr.mxu0 0.0
    %342 = vmatpush1.msra.mxu0 %v309
    %343 = vmatprep.subr.mxu0 0.0
    %344 = vmatpush1.msra.mxu0 %v310
    %345 = vmatprep.subr.mxu0 0.0
    %346 = vmatpush1.msra.mxu0 %v311
    %347 = vmatprep.subr.mxu0 0.0
    %348 = vmatpush1.msra.mxu0 %v312
    %349 = vmatprep.subr.mxu0 0.0
    %350 = vmatpush1.msra.mxu0 %v313
    %351 = vmatprep.subr.mxu0 0.0
    %352 = vmatpush1.msra.mxu0 %v314
    %353 = vmatprep.subr.mxu0 0.0
    %354 = vmatpush1.msra.mxu0 %v315
    %355 = vmatprep.subr.mxu0 0.0
    %356 = vmatpush1.msra.mxu0 0.0
    %357 = vmatprep.subr.mxu0 0.0
    %358 = vmatpush1.msra.mxu0 0.0
    %359 = vmatprep.subr.mxu0 0.0
    %360 = vmatpush1.msra.mxu0 0.0
    %361 = vmatprep.subr.mxu0 0.0
    %362 = vmatpush1.msra.mxu0 0.0
    %363 = vmatprep.subr.mxu0 0.0
    %364 = vmatpush1.msra.mxu0 0.0
    %365 = vmatprep.subr.mxu0 0.0
    %366 = vmatpush1.msra.mxu0 0.0
    %367 = vmatprep.subr.mxu0 0.0
    %368 = vmatpush1.msra.mxu0 0.0
    %369 = vmatprep.subr.mxu0 0.0
    %370 = vmatpush1.msra.mxu0 0.0
    %371 = vmatprep.subr.mxu0 0.0
    %372 = vmatpush1.msra.mxu0 0.0
    %373 = vmatprep.subr.mxu0 0.0
    %374 = vmatpush1.msra.mxu0 0.0
    %375 = vmatprep.subr.mxu0 0.0
    %376 = vmatpush1.msra.mxu0 0.0
    %377 = vmatprep.subr.mxu0 0.0
    %378 = vmatpush1.msra.mxu0 0.0
    %379 = vmatprep.subr.mxu0 0.0
    %380 = vmatpush1.msra.mxu0 0.0
    %381 = vmatprep.subr.mxu0 0.0
    %382 = vmatpush1.msra.mxu0 0.0
    %383 = vmatprep.subr.mxu0 0.0
    %384 = vmatpush1.msra.mxu0 0.0
    %385 = vmatprep.subr.mxu0 0.0
    %386 = vmatpush1.msra.mxu0 0.0
    %387 = vmatprep.mubr.f32.mxu0 0.0
    %388 = vmatmul.mubr.f32.gmra.mrb[0].mxu0 %v298
    %v389 = vpop.f32.mrb[0].mxu0
    %v390 = vadd.f32 %v321, %v389
    %v391 = vpop.f32.mrb[0].mxu0
    %392 = vdwg.mxu0
    %vm393 = vcmp.ge.f32.partialorder %v390, 0.0
    %v394 = vmul.f32 %v390, 0.05
    %v395 = vsel %vm393, %v390, %v394
    %396 = vst [vmem:[#allocation14] sm:$0xff] %v395
    %v397 = vld [vmem:[#allocation10] sm:$0xff]
    %v398 = vld [vmem:[#allocation10 + $0x8] sm:$0xff]
    %v399 = vld [vmem:[#allocation10 + $0x10] sm:$0xff]
    %v400 = vld [vmem:[#allocation10 + $0x18] sm:$0xff]
    %v401 = vld [vmem:[#allocation10 + $0x20] sm:$0xff]
    %v402 = vld [vmem:[#allocation10 + $0x28] sm:$0xff]
    %v403 = vld [vmem:[#allocation10 + $0x30] sm:$0xff]
    %v404 = vld [vmem:[#allocation10 + $0x38] sm:$0xff]
    %v405 = vld [vmem:[#allocation10 + $0x40] sm:$0xff]
    %v406 = vld [vmem:[#allocation10 + $0x48] sm:$0xff]
    %v407 = vld [vmem:[#allocation10 + $0x50] sm:$0xff]
    %v408 = vld [vmem:[#allocation10 + $0x58] sm:$0xff]
    %v409 = vld [vmem:[#allocation10 + $0x60] sm:$0xff]
    %v410 = vld [vmem:[#allocation10 + $0x68] sm:$0xff]
    %v411 = vld [vmem:[#allocation10 + $0x70] sm:$0xff]
    %v412 = vld [vmem:[#allocation10 + $0x78] sm:$0xff]
    %v413 = vld [vmem:[%s8] sm:$0x1]
    %v415 = vlaneseq
    %v416 = vshrl.u32 %v415, 7
    %v417 = vsub.s32 0, %v416
    %v418 = vrot.slane %v413, %v417
    %420 = vmatprep.subr.mxu0 0.0
    %421 = vmatpush1.msra.mxu0 %v397
    %422 = vmatprep.subr.mxu0 0.0
    %423 = vmatpush1.msra.mxu0 %v398
    %424 = vmatprep.subr.mxu0 0.0
    %425 = vmatpush1.msra.mxu0 %v399
    %426 = vmatprep.subr.mxu0 0.0
    %427 = vmatpush1.msra.mxu0 %v400
    %428 = vmatprep.subr.mxu0 0.0
    %429 = vmatpush1.msra.mxu0 %v401
    %430 = vmatprep.subr.mxu0 0.0
    %431 = vmatpush1.msra.mxu0 %v402
    %432 = vmatprep.subr.mxu0 0.0
    %433 = vmatpush1.msra.mxu0 %v403
    %434 = vmatprep.subr.mxu0 0.0
    %435 = vmatpush1.msra.mxu0 %v404
    %436 = vmatprep.subr.mxu0 0.0
    %437 = vmatpush1.msra.mxu0 %v405
    %438 = vmatprep.subr.mxu0 0.0
    %439 = vmatpush1.msra.mxu0 %v406
    %440 = vmatprep.subr.mxu0 0.0
    %441 = vmatpush1.msra.mxu0 %v407
    %442 = vmatprep.subr.mxu0 0.0
    %443 = vmatpush1.msra.mxu0 %v408
    %444 = vmatprep.subr.mxu0 0.0
    %445 = vmatpush1.msra.mxu0 %v409
    %446 = vmatprep.subr.mxu0 0.0
    %447 = vmatpush1.msra.mxu0 %v410
    %448 = vmatprep.subr.mxu0 0.0
    %449 = vmatpush1.msra.mxu0 %v411
    %450 = vmatprep.subr.mxu0 0.0
    %451 = vmatpush1.msra.mxu0 %v412
    %452 = vmatprep.subr.mxu0 0.0
    %453 = vmatpush1.msra.mxu0 0.0
    %454 = vmatprep.subr.mxu0 0.0
    %455 = vmatpush1.msra.mxu0 0.0
    %456 = vmatprep.subr.mxu0 0.0
    %457 = vmatpush1.msra.mxu0 0.0
    %458 = vmatprep.subr.mxu0 0.0
    %459 = vmatpush1.msra.mxu0 0.0
    %460 = vmatprep.subr.mxu0 0.0
    %461 = vmatpush1.msra.mxu0 0.0
    %462 = vmatprep.subr.mxu0 0.0
    %463 = vmatpush1.msra.mxu0 0.0
    %464 = vmatprep.subr.mxu0 0.0
    %465 = vmatpush1.msra.mxu0 0.0
    %466 = vmatprep.subr.mxu0 0.0
    %467 = vmatpush1.msra.mxu0 0.0
    %468 = vmatprep.subr.mxu0 0.0
    %469 = vmatpush1.msra.mxu0 0.0
    %470 = vmatprep.subr.mxu0 0.0
    %471 = vmatpush1.msra.mxu0 0.0
    %472 = vmatprep.subr.mxu0 0.0
    %473 = vmatpush1.msra.mxu0 0.0
    %474 = vmatprep.subr.mxu0 0.0
    %475 = vmatpush1.msra.mxu0 0.0
    %476 = vmatprep.subr.mxu0 0.0
    %477 = vmatpush1.msra.mxu0 0.0
    %478 = vmatprep.subr.mxu0 0.0
    %479 = vmatpush1.msra.mxu0 0.0
    %480 = vmatprep.subr.mxu0 0.0
    %481 = vmatpush1.msra.mxu0 0.0
    %482 = vmatprep.subr.mxu0 0.0
    %483 = vmatpush1.msra.mxu0 0.0
    %484 = vmatprep.mubr.f32.mxu0 0.0
    %485 = vmatmul.mubr.f32.gmra.mrb[0].mxu0 %v395
    %v486 = vpop.f32.mrb[0].mxu0
    %v487 = vadd.f32 %v418, %v486
    %v488 = vpop.f32.mrb[0].mxu0
    %489 = vdwg.mxu0
    %490 = vst [vmem:[#allocation15] sm:$0xff] %v487
    // Predicated region
    $region58: #{tpu_custom_call.1} parent=1 // pred_check
      _
    $region59: #{tpu_custom_call.1} parent=1 // pred_check_branch
      %492 = sbr.rel (0) target = $region61
    $region60: #{tpu_custom_call.1} parent=1 // pred_region
      %s494 = ssub.s32 128, 128
      %495 = vsyncadd [#allocation4], %s494
      %s497 = sshll.u32 [#allocation11], 4
      %s498 = int_to_ptr.vmem [resolvable:$true] %s497
      %500 = dma.vmem_to_hbm [thread:$0]  %s498, 128, %s9, [#allocation4]
    $region61: #{tpu_custom_call.1} parent=1 // pred_fallthru
      _
    // Predicated region
    $region62: #{tpu_custom_call.1} parent=1 // pred_check
      _
    $region63: #{tpu_custom_call.1} parent=1 // pred_check_branch
      %502 = sbr.rel (0) target = $region65
    $region64: #{tpu_custom_call.1} parent=1 // pred_region
      %s504 = ssub.s32 128, 128
      %505 = vsyncadd [#allocation13], %s504
      %s507 = sshll.u32 [#allocation12], 4
      %s508 = int_to_ptr.vmem [resolvable:$true] %s507
      %510 = dma.vmem_to_hbm [thread:$0]  %s508, 128, %s10, [#allocation13]
    $region65: #{tpu_custom_call.1} parent=1 // pred_fallthru
      _
    // Predicated region
    $region66: #{tpu_custom_call.1} parent=1 // pred_check
      _
    $region67: #{tpu_custom_call.1} parent=1 // pred_check_branch
      %512 = sbr.rel (0) target = $region69
    $region68: #{tpu_custom_call.1} parent=1 // pred_region
      %s514 = ssub.s32 128, 128
      %515 = vsyncadd [#allocation13], %s514
      %s517 = sshll.u32 [#allocation14], 4
      %s518 = int_to_ptr.vmem [resolvable:$true] %s517
      %520 = dma.vmem_to_hbm [thread:$0]  %s518, 128, %s11, [#allocation13]
    $region69: #{tpu_custom_call.1} parent=1 // pred_fallthru
      _
    // Predicated region
    $region70: #{tpu_custom_call.1} parent=1 // pred_check
      _
    $region71: #{tpu_custom_call.1} parent=1 // pred_check_branch
      %522 = sbr.rel (0) target = $region73
    $region72: #{tpu_custom_call.1} parent=1 // pred_region
      %s524 = ssub.s32 128, 128
      %525 = vsyncadd [#allocation16], %s524
      %s527 = sshll.u32 [#allocation15], 4
      %s528 = int_to_ptr.vmem [resolvable:$true] %s527
      %530 = dma.vmem_to_hbm [thread:$0]  %s528, 128, %s12, [#allocation16]
    $region73: #{tpu_custom_call.1} parent=1 // pred_fallthru
      _
    // Predicated region
    $region74: #{tpu_custom_call.1} parent=1 // pred_check
      _
    $region75: #{tpu_custom_call.1} parent=1 // pred_check_branch
      %532 = sbr.rel (0) target = $region77
    $region76: #{tpu_custom_call.1} parent=1 // pred_region
      %533 = dma.done [#allocation4], 128
    $region77: #{tpu_custom_call.1} parent=1 // pred_fallthru
      _
    // Predicated region
    $region78: #{tpu_custom_call.1} parent=1 // pred_check
      _
    $region79: #{tpu_custom_call.1} parent=1 // pred_check_branch
      %535 = sbr.rel (0) target = $region81
    $region80: #{tpu_custom_call.1} parent=1 // pred_region
      %536 = dma.done [#allocation13], 128
    $region81: #{tpu_custom_call.1} parent=1 // pred_fallthru
      _
    // Predicated region
    $region82: #{tpu_custom_call.1} parent=1 // pred_check
      _
    $region83: #{tpu_custom_call.1} parent=1 // pred_check_branch
      %538 = sbr.rel (0) target = $region85
    $region84: #{tpu_custom_call.1} parent=1 // pred_region
      %539 = dma.done [#allocation13], 128
    $region85: #{tpu_custom_call.1} parent=1 // pred_fallthru
      _
    // Predicated region
    $region86: #{tpu_custom_call.1} parent=1 // pred_check
      _
    $region87: #{tpu_custom_call.1} parent=1 // pred_check_branch
      %541 = sbr.rel (0) target = $region89
    $region88: #{tpu_custom_call.1} parent=1 // pred_region
      %542 = dma.done [#allocation16], 128
    $region89: #{tpu_custom_call.1} parent=1 // pred_fallthru
      _
    %543 = vsyncpa [#allocation3], 1
    %544 = vsyncpa [#allocation6], 1
    %545 = vsyncpa [#allocation9], 1
    %546 = vsyncpa [#allocation4], 1
    %547 = vsyncpa [#allocation13], 1
    %548 = vsyncpa [#allocation16], 1

</llo_original>
